<compile_context>
chip_gen: v7x
topology: tpu7x:2x2x1
jax: 0.10.0
libtpu: 0.0.40
codegen_flags: <defaults>
</compile_context>

<pallas_src>
import functools

import jax
import jax.numpy as jnp
from jax.experimental import pallas as pl
from jax.experimental.pallas import tpu as pltpu


def _guidance_kernel(x_ref, t_ref, a_ref, ak_ref, bt_ref, ba_ref, o_ref):
    """One row tile:  out = clip(x @ A^k + target @ Bt - action @ Ba, -1, 1).

    x_ref  : (TM, PD)  packed x_guidance rows (native dtype)
    t_ref  : (TM, PT)  packed target rows
    a_ref  : (TM, PA)  packed action rows
    ak_ref : (PD, PD)  block-diagonal kron(I_pack, A^guidance_step)   (f32)
    bt_ref : (PT, PD)  block-diagonal kron(I_pack, Bt)                (f32)
    ba_ref : (PA, PD)  block-diagonal kron(I_pack, Ba)                (f32)
    o_ref  : (TM, PD)  updated + clipped rows (aliases the x input)
    """
    x = x_ref[...].astype(jnp.float32)
    t = t_ref[...].astype(jnp.float32)
    a = a_ref[...].astype(jnp.float32)
    y = jnp.dot(x, ak_ref[...], preferred_element_type=jnp.float32)
    y = y + jnp.dot(t, bt_ref[...], preferred_element_type=jnp.float32)
    y = y - jnp.dot(a, ba_ref[...], preferred_element_type=jnp.float32)
    o_ref[...] = jnp.clip(y, -1.0, 1.0).astype(o_ref.dtype)


def guidance_loss_forward(x_guidance, action, target, w, *, guidance_step,
                          scale, grad_scale=None, tm=2048):
    """Pallas implementation of GuidanceLoss.forward with a quadratic loss."""
    B, S, D = x_guidance.shape
    A = action.shape[-1]
    assert A == 3, "GuidanceLoss update pattern implies action dim == 3"
    T = target.shape[-1]
    M = B * S
    f32 = jnp.float32
    out_dtype = x_guidance.dtype

    if grad_scale is None:
        gs = 1.0
    else:
        # TODO(synk): per-element grad_scale tensors are not supported here.
        gs = float(grad_scale)

    # ---- tiny D-sized precompute (plain XLA, negligible HBM traffic) -------
    wf = w.astype(f32)
    G = wf @ wf.T                                   # (D, D) = W W^T
    col = jnp.arange(D)
    maskf = (col < D - A).astype(f32)               # action rows don't feed loss
    step = jnp.where(col < D - A, scale / 15.0, scale).astype(f32) * gs

    # One guidance step is the affine map  x <- x @ Amat + c_hat.
    Ghat = (G * maskf[:, None]) * step[None, :]     # diag(mask) G diag(step)
    Amat = jnp.eye(D, dtype=f32) - Ghat
    # Collapse guidance_step iterations:
    #   x_k = x0 @ A^k + c_hat @ S,   S = I + A + ... + A^{k-1}
    Ak = jnp.eye(D, dtype=f32)
    Ssum = jnp.zeros((D, D), dtype=f32)
    for _ in range(int(guidance_step)):
        Ssum = Ssum + Ak
        Ak = Ak @ Amat
    #   c_hat = target @ (W^T * step) - action @ (G[-A:] * step)
    Bt = (wf.T * step[None, :]) @ Ssum              # (T, D)
    Ba = (G[D - A:, :] * step[None, :]) @ Ssum      # (A, D)

    # ---- lane packing: present slabs as [M/pack, pack*D] (128 lanes) -------
    pack = 128 // D if (D <= 128 and 128 % D == 0) else 1
    PD = pack * D

    def pad_cols(n):
        npad = n
        while (pack * npad) % 8 != 0:
            npad += 1
        return npad

    Tpad = pad_cols(T)
    Apad = pad_cols(A)
    PT = pack * Tpad
    PA = pack * Apad

    Mp = -(-M // pack)              # packed rows needed
    M1 = Mp * pack                  # unpacked rows after pad-to-pack

    # Row tiling: big tiles amortize the ~0.35us/grid-step overhead; no forced
    # multi-tile split (pure overhead on single-TC v5e/v6e); ceil-div grid.
    if Mp <= int(tm):
        tm_eff = Mp                 # one block == full array dim
    else:
        tm_eff = max(8, (int(tm) // 8) * 8)
    Mp2 = -(-Mp // tm_eff) * tm_eff
    grid = Mp2 // tm_eff

    def to_packed(a2, cols, cols_pad):
        a2p = a2
        if cols_pad != cols:
            a2p = jnp.pad(a2p, ((0, 0), (0, cols_pad - cols)))
        if M1 != M:
            a2p = jnp.pad(a2p, ((0, M1 - M), (0, 0)))
        a2p = a2p.reshape(Mp, pack * cols_pad)
        if Mp2 != Mp:
            a2p = jnp.pad(a2p, ((0, Mp2 - Mp), (0, 0)))
        return a2p

    def kron_pack(mat, rows, rows_pad):
        m = mat
        if rows_pad != rows:
            m = jnp.pad(m, ((0, rows_pad - rows), (0, 0)))
        if pack > 1:
            m = jnp.kron(jnp.eye(pack, dtype=f32), m)
        return m

    # Native-dtype HBM streams; f32 cast happens only inside the kernel.
    x4 = to_packed(x_guidance.reshape(M, D), D, D)
    t4 = to_packed(target.reshape(M, T), T, Tpad)
    a4 = to_packed(action.reshape(M, A), A, Apad)
    AkP = kron_pack(Ak, D, D)
    BtP = kron_pack(Bt, T, Tpad)
    BaP = kron_pack(Ba, A, Apad)

    out = pl.pallas_call(
        _guidance_kernel,
        out_shape=jax.ShapeDtypeStruct((Mp2, PD), out_dtype),
        grid=(grid,),
        in_specs=[
            pl.BlockSpec((tm_eff, PD), lambda i: (i, 0)),   # x rows (packed)
            pl.BlockSpec((tm_eff, PT), lambda i: (i, 0)),   # target rows
            pl.BlockSpec((tm_eff, PA), lambda i: (i, 0)),   # action rows
            pl.BlockSpec((PD, PD), lambda i: (0, 0)),       # A^k     (shared)
            pl.BlockSpec((PT, PD), lambda i: (0, 0)),       # Bt      (shared)
            pl.BlockSpec((PA, PD), lambda i: (0, 0)),       # Ba      (shared)
        ],
        out_specs=pl.BlockSpec((tm_eff, PD), lambda i: (i, 0)),
        input_output_aliases={0: 0},                         # x updated in place
        compiler_params=pltpu.CompilerParams(
            dimension_semantics=("parallel",)),
    )(x4, t4, a4, AkP, BtP, BaP)

    out = out[:Mp].reshape(M1, D)[:M].reshape(B, S, D)
    return out


def _reference(x_guidance, action, target, w, *, guidance_step, scale,
               grad_scale=None):
    """Pure-JAX reference mirroring the PyTorch semantics."""
    x = x_guidance.astype(jnp.float32)
    act = action.astype(jnp.float32)
    tgt = target.astype(jnp.float32)
    wf = w.astype(jnp.float32)
    gs = 1.0 if grad_scale is None else float(grad_scale)
    for _ in range(guidance_step):
        z = jnp.concatenate([x[..., :-3], act], axis=-1)
        r = jnp.einsum("bsd,dt->bst", z, wf) - tgt
        grad = jnp.einsum("bst,dt->bsd", r, wf)   # dL/dz
        grad = grad * gs
        x = jnp.concatenate(
            [x[..., :-3] - scale / 15.0 * grad[..., :-3],
             x[..., -3:] - scale * grad[..., -3:]], axis=-1)
    return jnp.clip(x, -1.0, 1.0)


if __name__ == "__main__":
    # Small shapes: batch=2, horizon=8, feature dim D=32 (29 state + 3 action
    # slots), action dim=3, target dim=16.
    B, S, D, T = 2, 8, 32, 16
    GUIDANCE_STEP = 2       # cfg.GUIDANCE.STEP
    CLASSIFIER_SCALE = 0.5  # cfg.GUIDANCE.CLASSIFIER_SCALE
    GRAD_SCALE = 1.25

    key = jax.random.PRNGKey(0)
    k1, k2, k3, k4 = jax.random.split(key, 4)
    x_guidance = jax.random.uniform(k1, (B, S, D), jnp.float32, -1.0, 1.0)
    action = jax.random.uniform(k2, (B, S, 3), jnp.float32, -1.0, 1.0)
    target = jax.random.normal(k3, (B, S, T), jnp.float32) * 0.1
    # Deterministic synthetic loss weight (module __init__ is config-driven).
    w = jax.random.normal(k4, (D, T), jnp.float32) * 0.1

    fwd = jax.jit(functools.partial(
        guidance_loss_forward,
        guidance_step=GUIDANCE_STEP, scale=CLASSIFIER_SCALE,
        grad_scale=GRAD_SCALE))
    out = jax.block_until_ready(fwd(x_guidance, action, target, w))

    ref = _reference(x_guidance, action, target, w,
                     guidance_step=GUIDANCE_STEP, scale=CLASSIFIER_SCALE,
                     grad_scale=GRAD_SCALE)
    assert out.shape == (B, S, D)
    assert jnp.all(out <= 1.0) and jnp.all(out >= -1.0)
    assert jnp.allclose(out, ref, atol=1e-3, rtol=1e-3)

    # Second config: odd row count, grad_scale=None, small tiles -> exercises
    # row padding and the multi-tile grid path.
    B2, S2 = 3, 37
    k5, k6, k7 = jax.random.split(k1, 3)
    xg2 = jax.random.uniform(k5, (B2, S2, D), jnp.float32, -1.0, 1.0)
    ac2 = jax.random.uniform(k6, (B2, S2, 3), jnp.float32, -1.0, 1.0)
    tg2 = jax.random.normal(k7, (B2, S2, T), jnp.float32) * 0.1
    fwd2 = jax.jit(functools.partial(
        guidance_loss_forward, guidance_step=3, scale=CLASSIFIER_SCALE,
        grad_scale=None, tm=8))
    out2 = jax.block_until_ready(fwd2(xg2, ac2, tg2, w))
    ref2 = _reference(xg2, ac2, tg2, w, guidance_step=3,
                      scale=CLASSIFIER_SCALE, grad_scale=None)
    assert out2.shape == (B2, S2, D)
    assert jnp.allclose(out2, ref2, atol=1e-3, rtol=1e-3)

    print("KERNEL_OK")
</pallas_src>

<mosaic_0001>
module attributes {stable_mosaic.version = 11 : i64} {
  func.func @_guidance_kernel(%arg0: i32, %arg1: memref<4x128xf32, #tpu.memory_space<vmem>>, %arg2: memref<4x64xf32, #tpu.memory_space<vmem>>, %arg3: memref<4x16xf32, #tpu.memory_space<vmem>>, %arg4: memref<128x128xf32, #tpu.memory_space<vmem>>, %arg5: memref<64x128xf32, #tpu.memory_space<vmem>>, %arg6: memref<16x128xf32, #tpu.memory_space<vmem>>, %arg7: memref<4x128xf32, #tpu.memory_space<vmem>>) attributes {dimension_semantics = [#tpu.dimension_semantics<parallel>], iteration_bounds = array<i64: 1>, scalar_prefetch = 0 : i64, scratch_operands = 0 : i64, tpu.core_type = #tpu.core_type<tc>, window_params = [{transform_indices = @transform_0, window_bounds = array<i64: 4, 128>}, {transform_indices = @transform_1, window_bounds = array<i64: 4, 64>}, {transform_indices = @transform_2, window_bounds = array<i64: 4, 16>}, {pipeline_mode = #tpu.pipeline_mode<synchronous>, transform_indices = @transform_3, window_bounds = array<i64: 128, 128>}, {pipeline_mode = #tpu.pipeline_mode<synchronous>, transform_indices = @transform_4, window_bounds = array<i64: 64, 128>}, {pipeline_mode = #tpu.pipeline_mode<synchronous>, transform_indices = @transform_5, window_bounds = array<i64: 16, 128>}, {transform_indices = @transform_6, window_bounds = array<i64: 4, 128>}]} {
    %c0 = arith.constant 0 : index
    %c0_0 = arith.constant 0 : index
    %0 = vector.load %arg1[%c0, %c0_0] : memref<4x128xf32, #tpu.memory_space<vmem>>, vector<4x128xf32>
    %c0_1 = arith.constant 0 : index
    %c0_2 = arith.constant 0 : index
    %1 = vector.load %arg2[%c0_1, %c0_2] : memref<4x64xf32, #tpu.memory_space<vmem>>, vector<4x64xf32>
    %c0_3 = arith.constant 0 : index
    %c0_4 = arith.constant 0 : index
    %2 = vector.load %arg3[%c0_3, %c0_4] : memref<4x16xf32, #tpu.memory_space<vmem>>, vector<4x16xf32>
    %c0_5 = arith.constant 0 : index
    %c0_6 = arith.constant 0 : index
    %3 = vector.load %arg4[%c0_5, %c0_6] : memref<128x128xf32, #tpu.memory_space<vmem>>, vector<128x128xf32>
    %cst = arith.constant dense<0.000000e+00> : vector<4x128xf32>
    %4 = tpu.matmul %0, %3, %cst {dimension_numbers = #tpu.dot_dimension_numbers<[1], [0], [0], [1], [0, 0, 1, 1], [], []>} : vector<4x128xf32>, vector<128x128xf32>, vector<4x128xf32> -> vector<4x128xf32>
    %c0_7 = arith.constant 0 : index
    %c0_8 = arith.constant 0 : index
    %5 = vector.load %arg5[%c0_7, %c0_8] : memref<64x128xf32, #tpu.memory_space<vmem>>, vector<64x128xf32>
    %cst_9 = arith.constant dense<0.000000e+00> : vector<4x128xf32>
    %6 = tpu.matmul %1, %5, %cst_9 {dimension_numbers = #tpu.dot_dimension_numbers<[1], [0], [0], [1], [0, 0, 1, 1], [], []>} : vector<4x64xf32>, vector<64x128xf32>, vector<4x128xf32> -> vector<4x128xf32>
    %7 = arith.addf %4, %6 : vector<4x128xf32>
    %c0_10 = arith.constant 0 : index
    %c0_11 = arith.constant 0 : index
    %8 = vector.load %arg6[%c0_10, %c0_11] : memref<16x128xf32, #tpu.memory_space<vmem>>, vector<16x128xf32>
    %cst_12 = arith.constant dense<0.000000e+00> : vector<4x128xf32>
    %9 = tpu.matmul %2, %8, %cst_12 {dimension_numbers = #tpu.dot_dimension_numbers<[1], [0], [0], [1], [0, 0, 1, 1], [], []>} : vector<4x16xf32>, vector<16x128xf32>, vector<4x128xf32> -> vector<4x128xf32>
    %10 = arith.subf %7, %9 : vector<4x128xf32>
    %cst_13 = arith.constant -1.000000e+00 : f32
    %cst_14 = arith.constant 1.000000e+00 : f32
    %11 = vector.broadcast %cst_13 : f32 to vector<4x128xf32>
    %12 = arith.maximumf %11, %10 : vector<4x128xf32>
    %13 = vector.broadcast %cst_14 : f32 to vector<4x128xf32>
    %14 = arith.minimumf %13, %12 : vector<4x128xf32>
    %c0_15 = arith.constant 0 : index
    %c0_16 = arith.constant 0 : index
    %15 = vector.load %arg7[%c0_15, %c0_16] : memref<4x128xf32, #tpu.memory_space<vmem>>, vector<4x128xf32>
    tpu.vector_store %arg7[%c0_15, %c0_16], %14 {strides = array<i32>} : memref<4x128xf32, #tpu.memory_space<vmem>>, vector<4x128xf32>,
    return
  }
  func.func @transform_0(%arg0: i32) -> (i32, i32) {
    %c0_i32 = arith.constant 0 : i32
    %c0_i32_0 = arith.constant 0 : i32
    return %arg0, %c0_i32 : i32, i32
  }
  func.func @transform_1(%arg0: i32) -> (i32, i32) {
    %c0_i32 = arith.constant 0 : i32
    %c0_i32_0 = arith.constant 0 : i32
    return %arg0, %c0_i32 : i32, i32
  }
  func.func @transform_2(%arg0: i32) -> (i32, i32) {
    %c0_i32 = arith.constant 0 : i32
    %c0_i32_0 = arith.constant 0 : i32
    return %arg0, %c0_i32 : i32, i32
  }
  func.func @transform_3(%arg0: i32) -> (i32, i32) {
    %c0_i32 = arith.constant 0 : i32
    %c0_i32_0 = arith.constant 0 : i32
    %c0_i32_1 = arith.constant 0 : i32
    return %c0_i32, %c0_i32_0 : i32, i32
  }
  func.func @transform_4(%arg0: i32) -> (i32, i32) {
    %c0_i32 = arith.constant 0 : i32
    %c0_i32_0 = arith.constant 0 : i32
    %c0_i32_1 = arith.constant 0 : i32
    return %c0_i32, %c0_i32_0 : i32, i32
  }
  func.func @transform_5(%arg0: i32) -> (i32, i32) {
    %c0_i32 = arith.constant 0 : i32
    %c0_i32_0 = arith.constant 0 : i32
    %c0_i32_1 = arith.constant 0 : i32
    return %c0_i32, %c0_i32_0 : i32, i32
  }
  func.func @transform_6(%arg0: i32) -> (i32, i32) {
    %c0_i32 = arith.constant 0 : i32
    %c0_i32_0 = arith.constant 0 : i32
    return %arg0, %c0_i32 : i32, i32
  }
}

</mosaic_0001>

<llo_original>
// kernel: guidance_loss_forward.1
$region0: #{guidance_loss_forward.1}
  #allocation0 [shape = 'u32[]', space=smem, size = 0x4, offset = 0x4, fixed_abs, tag = 'smem constant byte address 0x4 - core index']
  #allocation1 [shape = 'u32[144,128]{1,0:T(1,128)}', space=vmem, size = 0x12000, scoped, tag = 'internal scratch']
  %s0 = inlined_call_operand.vmem [shape: f32[4,128], index: 0, kind: input, shape index: {}, may-alias: {0,6}]
  %s1 = inlined_call_operand.vmem [shape: f32[4,64], index: 1, kind: input, shape index: {}]
  %s2 = inlined_call_operand.vmem [shape: f32[4,16], index: 2, kind: input, shape index: {}]
  %s3 = inlined_call_operand.vmem [shape: f32[128,128], index: 3, kind: input, shape index: {}]
  %s4 = inlined_call_operand.vmem [shape: f32[64,128], index: 4, kind: input, shape index: {}]
  %s5 = inlined_call_operand.vmem [shape: f32[16,128], index: 5, kind: input, shape index: {}]
  %s6 = inlined_call_operand.vmem [shape: f32[4,128], index: 6, kind: output, shape index: {}, may-alias: {0,6}]
  %s7 = sld [smem:[#allocation0]]
  $region34: #{guidance_loss_forward.1} parent=0
    _
  %s9 = ssub.s32 1, %s7
  %s10 = scalar_select 0, %s9, %s7
  // Predicated region
  $region2: #{guidance_loss_forward.1} parent=0 // pred_check
    _
  $region3: #{guidance_loss_forward.1} parent=0 // pred_check_branch
    %12 = sbr.rel (0) target = $region5
  $region4: #{guidance_loss_forward.1} parent=0 // pred_region
    _
  $region5: #{guidance_loss_forward.1} parent=0 // pred_fallthru
    _
  // Predicated region
  $region6: #{guidance_loss_forward.1} parent=0 // pred_check
    _
  $region7: #{guidance_loss_forward.1} parent=0 // pred_check_branch
    %14 = sbr.rel (0) target = $region9
  $region8: #{guidance_loss_forward.1} parent=0 // pred_region
    _
  $region9: #{guidance_loss_forward.1} parent=0 // pred_fallthru
    _
  // Predicated region
  $region10: #{guidance_loss_forward.1} parent=0 // pred_check
    _
  $region11: #{guidance_loss_forward.1} parent=0 // pred_check_branch
    %16 = sbr.rel (0) target = $region13
  $region12: #{guidance_loss_forward.1} parent=0 // pred_region
    _
  $region13: #{guidance_loss_forward.1} parent=0 // pred_fallthru
    _
  // Predicated region
  $region14: #{guidance_loss_forward.1} parent=0 // pred_check
    _
  $region15: #{guidance_loss_forward.1} parent=0 // pred_check_branch
    %18 = sbr.rel (0) target = $region17
  $region16: #{guidance_loss_forward.1} parent=0 // pred_region
    _
  $region17: #{guidance_loss_forward.1} parent=0 // pred_fallthru
    _
  // Predicated region
  $region18: #{guidance_loss_forward.1} parent=0 // pred_check
    _
  $region19: #{guidance_loss_forward.1} parent=0 // pred_check_branch
    %20 = sbr.rel (0) target = $region21
  $region20: #{guidance_loss_forward.1} parent=0 // pred_region
    _
  $region21: #{guidance_loss_forward.1} parent=0 // pred_fallthru
    _
  // Predicated region
  $region22: #{guidance_loss_forward.1} parent=0 // pred_check
    _
  $region23: #{guidance_loss_forward.1} parent=0 // pred_check_branch
    %22 = sbr.rel (0) target = $region25
  $region24: #{guidance_loss_forward.1} parent=0 // pred_region
    _
  $region25: #{guidance_loss_forward.1} parent=0 // pred_fallthru
    _
  %v23 = vld [vmem:[%s0] sm:$0xf]
  %v24 = vld [vmem:[%s1] sm:$0xf]
  %v25 = vld [vmem:[%s2] sm:$0xf]
  %v26 = vld [vmem:[%s3] sm:$0xff]
  %v27 = vld [vmem:[%s3 + $0x8] sm:$0xff]
  %v28 = vld [vmem:[%s3 + $0x10] sm:$0xff]
  %v29 = vld [vmem:[%s3 + $0x18] sm:$0xff]
  %v30 = vld [vmem:[%s3 + $0x20] sm:$0xff]
  %v31 = vld [vmem:[%s3 + $0x28] sm:$0xff]
  %v32 = vld [vmem:[%s3 + $0x30] sm:$0xff]
  %v33 = vld [vmem:[%s3 + $0x38] sm:$0xff]
  %v34 = vld [vmem:[%s3 + $0x40] sm:$0xff]
  %v35 = vld [vmem:[%s3 + $0x48] sm:$0xff]
  %v36 = vld [vmem:[%s3 + $0x50] sm:$0xff]
  %v37 = vld [vmem:[%s3 + $0x58] sm:$0xff]
  %v38 = vld [vmem:[%s3 + $0x60] sm:$0xff]
  %v39 = vld [vmem:[%s3 + $0x68] sm:$0xff]
  %v40 = vld [vmem:[%s3 + $0x70] sm:$0xff]
  %v41 = vld [vmem:[%s3 + $0x78] sm:$0xff]
  %v42 = vld [vmem:[%s4] sm:$0xff]
  %v43 = vld [vmem:[%s4 + $0x8] sm:$0xff]
  %v44 = vld [vmem:[%s4 + $0x10] sm:$0xff]
  %v45 = vld [vmem:[%s4 + $0x18] sm:$0xff]
  %v46 = vld [vmem:[%s4 + $0x20] sm:$0xff]
  %v47 = vld [vmem:[%s4 + $0x28] sm:$0xff]
  %v48 = vld [vmem:[%s4 + $0x30] sm:$0xff]
  %v49 = vld [vmem:[%s4 + $0x38] sm:$0xff]
  %vm50 = vcmask 523264
  %v52 = vsel %vm50, %v24, 0
  %54 = vmatprep.subr.mxu0 0.0
  %55 = vmatpush1.msra.mxu0 %v42
  %56 = vmatprep.subr.mxu0 0.0
  %57 = vmatpush1.msra.mxu0 %v43
  %58 = vmatprep.subr.mxu0 0.0
  %59 = vmatpush1.msra.mxu0 %v44
  %60 = vmatprep.subr.mxu0 0.0
  %61 = vmatpush1.msra.mxu0 %v45
  %62 = vmatprep.subr.mxu0 0.0
  %63 = vmatpush1.msra.mxu0 %v46
  %64 = vmatprep.subr.mxu0 0.0
  %65 = vmatpush1.msra.mxu0 %v47
  %66 = vmatprep.subr.mxu0 0.0
  %67 = vmatpush1.msra.mxu0 %v48
  %68 = vmatprep.subr.mxu0 0.0
  %69 = vmatpush1.msra.mxu0 %v49
  %70 = vmatprep.subr.mxu0 0.0
  %71 = vmatpush1.msra.mxu0 0.0
  %72 = vmatprep.subr.mxu0 0.0
  %73 = vmatpush1.msra.mxu0 0.0
  %74 = vmatprep.subr.mxu0 0.0
  %75 = vmatpush1.msra.mxu0 0.0
  %76 = vmatprep.subr.mxu0 0.0
  %77 = vmatpush1.msra.mxu0 0.0
  %78 = vmatprep.subr.mxu0 0.0
  %79 = vmatpush1.msra.mxu0 0.0
  %80 = vmatprep.subr.mxu0 0.0
  %81 = vmatpush1.msra.mxu0 0.0
  %82 = vmatprep.subr.mxu0 0.0
  %83 = vmatpush1.msra.mxu0 0.0
  %84 = vmatprep.subr.mxu0 0.0
  %85 = vmatpush1.msra.mxu0 0.0
  %86 = vmatprep.subr.mxu0 0.0
  %87 = vmatpush1.msra.mxu0 0.0
  %88 = vmatprep.subr.mxu0 0.0
  %89 = vmatpush1.msra.mxu0 0.0
  %90 = vmatprep.subr.mxu0 0.0
  %91 = vmatpush1.msra.mxu0 0.0
  %92 = vmatprep.subr.mxu0 0.0
  %93 = vmatpush1.msra.mxu0 0.0
  %94 = vmatprep.subr.mxu0 0.0
  %95 = vmatpush1.msra.mxu0 0.0
  %96 = vmatprep.subr.mxu0 0.0
  %97 = vmatpush1.msra.mxu0 0.0
  %98 = vmatprep.subr.mxu0 0.0
  %99 = vmatpush1.msra.mxu0 0.0
  %100 = vmatprep.subr.mxu0 0.0
  %101 = vmatpush1.msra.mxu0 0.0
  %102 = vmatprep.subr.mxu0 0.0
  %103 = vmatpush1.msra.mxu0 0.0
  %104 = vmatprep.subr.mxu0 0.0
  %105 = vmatpush1.msra.mxu0 0.0
  %106 = vmatprep.subr.mxu0 0.0
  %107 = vmatpush1.msra.mxu0 0.0
  %108 = vmatprep.subr.mxu0 0.0
  %109 = vmatpush1.msra.mxu0 0.0
  %110 = vmatprep.subr.mxu0 0.0
  %111 = vmatpush1.msra.mxu0 0.0
  %112 = vmatprep.subr.mxu0 0.0
  %113 = vmatpush1.msra.mxu0 0.0
  %114 = vmatprep.subr.mxu0 0.0
  %115 = vmatpush1.msra.mxu0 0.0
  %116 = vmatprep.subr.mxu0 0.0
  %117 = vmatpush1.msra.mxu0 0.0
  %118 = vmatprep.mubr.f32.mxu0 0.0
  %119 = vmatmul.mubr.f32.gmra.mrb[0].mxu0 %v52
  %v120 = vpop.f32.mrb[0].mxu0
  %v121 = vadd.f32 0.0, %v120
  %v122 = vpop.f32.mrb[0].mxu0
  %123 = vdwg.mxu0
  %124 = vmatprep.subr.mxu0 0.0
  %125 = vmatpush1.msra.mxu0 %v26
  %126 = vmatprep.subr.mxu0 0.0
  %127 = vmatpush1.msra.mxu0 %v27
  %128 = vmatprep.subr.mxu0 0.0
  %129 = vmatpush1.msra.mxu0 %v28
  %130 = vmatprep.subr.mxu0 0.0
  %131 = vmatpush1.msra.mxu0 %v29
  %132 = vmatprep.subr.mxu0 0.0
  %133 = vmatpush1.msra.mxu0 %v30
  %134 = vmatprep.subr.mxu0 0.0
  %135 = vmatpush1.msra.mxu0 %v31
  %136 = vmatprep.subr.mxu0 0.0
  %137 = vmatpush1.msra.mxu0 %v32
  %138 = vmatprep.subr.mxu0 0.0
  %139 = vmatpush1.msra.mxu0 %v33
  %140 = vmatprep.subr.mxu0 0.0
  %141 = vmatpush1.msra.mxu0 %v34
  %142 = vmatprep.subr.mxu0 0.0
  %143 = vmatpush1.msra.mxu0 %v35
  %144 = vmatprep.subr.mxu0 0.0
  %145 = vmatpush1.msra.mxu0 %v36
  %146 = vmatprep.subr.mxu0 0.0
  %147 = vmatpush1.msra.mxu0 %v37
  %148 = vmatprep.subr.mxu0 0.0
  %149 = vmatpush1.msra.mxu0 %v38
  %150 = vmatprep.subr.mxu0 0.0
  %151 = vmatpush1.msra.mxu0 %v39
  %152 = vmatprep.subr.mxu0 0.0
  %153 = vmatpush1.msra.mxu0 %v40
  %154 = vmatprep.subr.mxu0 0.0
  %155 = vmatpush1.msra.mxu0 %v41
  %156 = vmatprep.subr.mxu0 0.0
  %157 = vmatpush1.msra.mxu0 0.0
  %158 = vmatprep.subr.mxu0 0.0
  %159 = vmatpush1.msra.mxu0 0.0
  %160 = vmatprep.subr.mxu0 0.0
  %161 = vmatpush1.msra.mxu0 0.0
  %162 = vmatprep.subr.mxu0 0.0
  %163 = vmatpush1.msra.mxu0 0.0
  %164 = vmatprep.subr.mxu0 0.0
  %165 = vmatpush1.msra.mxu0 0.0
  %166 = vmatprep.subr.mxu0 0.0
  %167 = vmatpush1.msra.mxu0 0.0
  %168 = vmatprep.subr.mxu0 0.0
  %169 = vmatpush1.msra.mxu0 0.0
  %170 = vmatprep.subr.mxu0 0.0
  %171 = vmatpush1.msra.mxu0 0.0
  %172 = vmatprep.subr.mxu0 0.0
  %173 = vmatpush1.msra.mxu0 0.0
  %174 = vmatprep.subr.mxu0 0.0
  %175 = vmatpush1.msra.mxu0 0.0
  %176 = vmatprep.subr.mxu0 0.0
  %177 = vmatpush1.msra.mxu0 0.0
  %178 = vmatprep.subr.mxu0 0.0
  %179 = vmatpush1.msra.mxu0 0.0
  %180 = vmatprep.subr.mxu0 0.0
  %181 = vmatpush1.msra.mxu0 0.0
  %182 = vmatprep.subr.mxu0 0.0
  %183 = vmatpush1.msra.mxu0 0.0
  %184 = vmatprep.subr.mxu0 0.0
  %185 = vmatpush1.msra.mxu0 0.0
  %186 = vmatprep.subr.mxu0 0.0
  %187 = vmatpush1.msra.mxu0 0.0
  %188 = vmatprep.mubr.f32.mxu0 0.0
  %189 = vmatmul.mubr.f32.gmra.mrb[0].mxu0 %v23
  %v190 = vpop.f32.mrb[0].mxu0
  %v191 = vadd.f32 %v121, %v190
  %v192 = vpop.f32.mrb[0].mxu0
  %193 = vdwg.mxu0
  %v194 = vld [vmem:[%s5] sm:$0xff]
  %v195 = vld [vmem:[%s5 + $0x8] sm:$0xff]
  %vm196 = vcmask 130048
  %v198 = vsel %vm196, %v25, 0
  %200 = vmatprep.subr.mxu0 0.0
  %201 = vmatpush1.msra.mxu0 %v194
  %202 = vmatprep.subr.mxu0 0.0
  %203 = vmatpush1.msra.mxu0 %v195
  %204 = vmatprep.subr.mxu0 0.0
  %205 = vmatpush1.msra.mxu0 0.0
  %206 = vmatprep.subr.mxu0 0.0
  %207 = vmatpush1.msra.mxu0 0.0
  %208 = vmatprep.subr.mxu0 0.0
  %209 = vmatpush1.msra.mxu0 0.0
  %210 = vmatprep.subr.mxu0 0.0
  %211 = vmatpush1.msra.mxu0 0.0
  %212 = vmatprep.subr.mxu0 0.0
  %213 = vmatpush1.msra.mxu0 0.0
  %214 = vmatprep.subr.mxu0 0.0
  %215 = vmatpush1.msra.mxu0 0.0
  %216 = vmatprep.subr.mxu0 0.0
  %217 = vmatpush1.msra.mxu0 0.0
  %218 = vmatprep.subr.mxu0 0.0
  %219 = vmatpush1.msra.mxu0 0.0
  %220 = vmatprep.subr.mxu0 0.0
  %221 = vmatpush1.msra.mxu0 0.0
  %222 = vmatprep.subr.mxu0 0.0
  %223 = vmatpush1.msra.mxu0 0.0
  %224 = vmatprep.subr.mxu0 0.0
  %225 = vmatpush1.msra.mxu0 0.0
  %226 = vmatprep.subr.mxu0 0.0
  %227 = vmatpush1.msra.mxu0 0.0
  %228 = vmatprep.subr.mxu0 0.0
  %229 = vmatpush1.msra.mxu0 0.0
  %230 = vmatprep.subr.mxu0 0.0
  %231 = vmatpush1.msra.mxu0 0.0
  %232 = vmatprep.subr.mxu0 0.0
  %233 = vmatpush1.msra.mxu0 0.0
  %234 = vmatprep.subr.mxu0 0.0
  %235 = vmatpush1.msra.mxu0 0.0
  %236 = vmatprep.subr.mxu0 0.0
  %237 = vmatpush1.msra.mxu0 0.0
  %238 = vmatprep.subr.mxu0 0.0
  %239 = vmatpush1.msra.mxu0 0.0
  %240 = vmatprep.subr.mxu0 0.0
  %241 = vmatpush1.msra.mxu0 0.0
  %242 = vmatprep.subr.mxu0 0.0
  %243 = vmatpush1.msra.mxu0 0.0
  %244 = vmatprep.subr.mxu0 0.0
  %245 = vmatpush1.msra.mxu0 0.0
  %246 = vmatprep.subr.mxu0 0.0
  %247 = vmatpush1.msra.mxu0 0.0
  %248 = vmatprep.subr.mxu0 0.0
  %249 = vmatpush1.msra.mxu0 0.0
  %250 = vmatprep.subr.mxu0 0.0
  %251 = vmatpush1.msra.mxu0 0.0
  %252 = vmatprep.subr.mxu0 0.0
  %253 = vmatpush1.msra.mxu0 0.0
  %254 = vmatprep.subr.mxu0 0.0
  %255 = vmatpush1.msra.mxu0 0.0
  %256 = vmatprep.subr.mxu0 0.0
  %257 = vmatpush1.msra.mxu0 0.0
  %258 = vmatprep.subr.mxu0 0.0
  %259 = vmatpush1.msra.mxu0 0.0
  %260 = vmatprep.subr.mxu0 0.0
  %261 = vmatpush1.msra.mxu0 0.0
  %262 = vmatprep.subr.mxu0 0.0
  %263 = vmatpush1.msra.mxu0 0.0
  %264 = vmatprep.mubr.f32.mxu0 0.0
  %265 = vmatmul.mubr.f32.gmra.mrb[0].mxu0 %v198
  %v266 = vpop.f32.mrb[0].mxu0
  %v267 = vadd.f32 0.0, %v266
  %v268 = vpop.f32.mrb[0].mxu0
  %269 = vdwg.mxu0
  %v270 = vsub.f32 %v191, %v267
  %v271 = vmax.f32 %v270, -1.0
  %v272 = vmin.f32 %v271, 1.0
  %273 = vst [vmem:[%s6] sm:$0xf] %v272
  // Predicated region
  $region26: #{guidance_loss_forward.1} parent=0 // pred_check
    _
  $region27: #{guidance_loss_forward.1} parent=0 // pred_check_branch
    %275 = sbr.rel (0) target = $region29
  $region28: #{guidance_loss_forward.1} parent=0 // pred_region
    _
  $region29: #{guidance_loss_forward.1} parent=0 // pred_fallthru
    _
  // Predicated region
  $region30: #{guidance_loss_forward.1} parent=0 // pred_check
    _
  $region31: #{guidance_loss_forward.1} parent=0 // pred_check_branch
    %277 = sbr.rel (0) target = $region33
  $region32: #{guidance_loss_forward.1} parent=0 // pred_region
    _
  $region33: #{guidance_loss_forward.1} parent=0 // pred_fallthru
    _

</llo_original>
